<compile_context>
chip_gen: v5e
topology: v5e:2x2
jax: 0.10.0
libtpu: 0.0.40
codegen_flags: <defaults>
</compile_context>

<pallas_src>
import jax
import jax.numpy as jnp
from jax.experimental import pallas as pl
from jax.experimental.pallas import tpu as pltpu


# --------------------------------------------------------------------------
# VMEM budgeting / tile selection
# --------------------------------------------------------------------------

def _vmem_budget_bytes():
    """~75% of physical VMEM.  Fallback 64 MiB covers v7x's smaller VMEM:
    v5e/v6e -> ~96 MiB, v7x -> ~48 MiB."""
    cap = 64 * 1024 * 1024
    try:
        info = pltpu.get_tpu_info()
        cap = int(getattr(info, "vmem_capacity_bytes", cap))
    except Exception:
        pass
    return int(cap * 3 // 4)


def _pick_tile_n(batch, k, out_features, w_itemsize, budget_bytes):
    """Largest lane-dense column tile whose double-buffered working set fits
    the VMEM budget, preferring to keep >= 2 column tiles so v7x's two
    TensorCores both get a share of the 'parallel' grid."""
    if out_features % 128 != 0:
        return out_features                      # single full-width tile
    candidates = [t for t in (2048, 1024, 512, 256, 128)
                  if t <= out_features and out_features % t == 0]
    if not candidates:
        return out_features

    def vmem_cost(t):
        w_tile = 4 * k * t * w_itemsize          # stacked gate-weight tile
        b_tile = 4 * t * 4                       # f32 bias tile
        col_tiles = 3 * batch * t * 4            # c in + h/c out tiles
        xh = batch * k * w_itemsize              # constant activation block
        return 2 * (w_tile + b_tile + col_tiles + xh)   # double buffering

    for t in candidates:                          # prefer a grid of >= 2
        if out_features // t >= 2 and vmem_cost(t) <= budget_bytes:
            return t
    for t in candidates:
        if vmem_cost(t) <= budget_bytes:
            return t
    return 128


# --------------------------------------------------------------------------
# Single-step cell kernel (exactly the module's forward)
# --------------------------------------------------------------------------

def _lstm_cell_kernel(xh_ref, c_ref, w_ref, b_ref, h_out_ref, c_out_ref):
    # xh is already in the weight dtype (cast once in the wrapper).
    xh = xh_ref[...]
    c = c_ref[...].astype(jnp.float32)

    def gate_pre(g):
        # One wide dot per gate (K = in_features + out_features), f32 accum,
        # f32 bias.
        return (jnp.dot(xh, w_ref[g], preferred_element_type=jnp.float32)
                + b_ref[g])

    # NOTE: the PyTorch module names gate 0 "input_gate" but it multiplies the
    # old cell state (forget-style) and gate 1 scales the candidate.  The
    # module's semantics are preserved exactly.
    f = jax.nn.sigmoid(gate_pre(0))
    u = jax.nn.sigmoid(gate_pre(1))
    cc = jnp.tanh(gate_pre(2))
    o = jax.nn.sigmoid(gate_pre(3))

    c_new = f * c + u * cc
    h_new = jnp.tanh(c_new) * o

    h_out_ref[...] = h_new.astype(h_out_ref.dtype)
    c_out_ref[...] = c_new.astype(c_out_ref.dtype)


def lstm_forward(x, h, c, w, b, *, tn=None, out_dtype=None,
                 weight_buffer_count=None):
    """x: (B, in_features), h/c: (B, out_features),
    w: (4, in_features+out_features, out_features), b: (4, out_features).
    Returns (h_new, c_new)."""
    B, in_features = x.shape
    out_features = h.shape[1]
    K = in_features + out_features
    assert c.shape == (B, out_features)
    assert w.shape == (4, K, out_features)
    assert b.shape == (4, out_features)

    if out_dtype is None:
        out_dtype = x.dtype

    budget = _vmem_budget_bytes()
    w_itemsize = jnp.dtype(w.dtype).itemsize
    if tn is None:
        tn = _pick_tile_n(B, K, out_features, w_itemsize, budget)
    assert out_features % tn == 0
    grid = (out_features // tn,)

    # Build xh once (tiny copy) and cast it to the weight dtype here so the
    # kernel does not re-cast the (constant-across-grid) activations each
    # column tile.  Bias stays f32.
    xh = jnp.concatenate([x, h], axis=1).astype(w.dtype)
    b32 = b.astype(jnp.float32)

    w_spec_kwargs = {}
    if weight_buffer_count is not None:
        # e.g. 3 on v5e (slow HBM, plenty of VMEM) to cover exposed weight DMA.
        w_spec_kwargs["pipeline_mode"] = pl.Buffered(weight_buffer_count)
    w_spec = pl.BlockSpec((4, K, tn), lambda j: (0, 0, j), **w_spec_kwargs)

    in_specs = [
        pl.BlockSpec((B, K), lambda j: (0, 0)),      # xh (constant block)
        pl.BlockSpec((B, tn), lambda j: (0, j)),     # c column tile
        w_spec,                                       # fused weight tile
        pl.BlockSpec((4, tn), lambda j: (0, j)),      # f32 bias tile
    ]
    out_specs = (
        pl.BlockSpec((B, tn), lambda j: (0, j)),      # h_new
        pl.BlockSpec((B, tn), lambda j: (0, j)),      # c_new
    )

    h_new, c_new = pl.pallas_call(
        _lstm_cell_kernel,
        out_shape=(jax.ShapeDtypeStruct((B, out_features), out_dtype),
                   jax.ShapeDtypeStruct((B, out_features), out_dtype)),
        grid=grid,
        in_specs=in_specs,
        out_specs=out_specs,
        compiler_params=pltpu.CompilerParams(
            dimension_semantics=("parallel",),
            vmem_limit_bytes=budget),
    )(xh, c, w, b32)
    return h_new, c_new


# --------------------------------------------------------------------------
# Sequence kernel: time loop inside the kernel, weights VMEM-resident
# --------------------------------------------------------------------------

def _lstm_seq_kernel(x_ref, h0_ref, c0_ref, wx_ref, wh_ref, b_ref,
                     hseq_ref, hfin_ref, cfin_ref):
    t = pl.program_id(0)
    H = hfin_ref.shape[-1]

    @pl.when(t == 0)
    def _():
        hfin_ref[...] = h0_ref[...].astype(jnp.float32)
        cfin_ref[...] = c0_ref[...].astype(jnp.float32)

    x_t = x_ref[0]                                  # (B, in), weight dtype
    h_prev = hfin_ref[...].astype(wh_ref.dtype)     # cast for the MXU dot
    c_prev = cfin_ref[...]                          # f32 carry

    pre = (jnp.dot(x_t, wx_ref[...], preferred_element_type=jnp.float32)
           + jnp.dot(h_prev, wh_ref[...], preferred_element_type=jnp.float32)
           + b_ref[...])                            # (B, 4H) f32

    # Lane-aligned static gate slices (H is a multiple of 128).
    f = jax.nn.sigmoid(pre[:, 0 * H:1 * H])
    u = jax.nn.sigmoid(pre[:, 1 * H:2 * H])
    cc = jnp.tanh(pre[:, 2 * H:3 * H])
    o = jax.nn.sigmoid(pre[:, 3 * H:4 * H])

    c_new = f * c_prev + u * cc
    h_new = jnp.tanh(c_new) * o

    hfin_ref[...] = h_new                           # resident carries
    cfin_ref[...] = c_new
    hseq_ref[0] = h_new.astype(hseq_ref.dtype)


def lstm_sequence_forward(x_seq, h0, c0, w, b):
    """Applies the cell over a whole sequence with the time loop *inside* the
    kernel.  The weight index_maps ignore t, so Wx/Wh are DMA'd into VMEM once
    and stay resident for all T steps; h/c are carried in the grid-resident
    final-state output blocks.  Returns (h_seq, h_final, c_final)."""
    T, B, in_features = x_seq.shape
    out_features = h0.shape[1]
    K = in_features + out_features
    assert c0.shape == (B, out_features)
    assert w.shape == (4, K, out_features)
    assert b.shape == (4, out_features)
    assert out_features % 128 == 0, "lane-aligned gate slices need out % 128 == 0"

    budget = _vmem_budget_bytes()
    resident_bytes = 4 * K * out_features * jnp.dtype(w.dtype).itemsize
    assert 2 * resident_bytes < budget, \
        "weights too large to stay VMEM-resident: use bf16 or the per-step kernel"

    # Split + flatten the stacked weights so no in-kernel concat is needed:
    # pre = x_t @ Wx2 + h_{t-1} @ Wh2, gate g occupies columns [g*H, (g+1)*H).
    wx2 = jnp.concatenate([w[g, :in_features, :] for g in range(4)], axis=1)
    wh2 = jnp.concatenate([w[g, in_features:, :] for g in range(4)], axis=1)
    b2 = b.reshape(1, 4 * out_features).astype(jnp.float32)
    x_seq = x_seq.astype(w.dtype)                   # cast once, not per step

    grid = (T,)
    in_specs = [
        pl.BlockSpec((1, B, in_features), lambda t: (t, 0, 0)),            # x_t
        pl.BlockSpec((B, out_features), lambda t: (0, 0)),                 # h0
        pl.BlockSpec((B, out_features), lambda t: (0, 0)),                 # c0
        pl.BlockSpec((in_features, 4 * out_features), lambda t: (0, 0)),   # Wx (resident)
        pl.BlockSpec((out_features, 4 * out_features), lambda t: (0, 0)),  # Wh (resident)
        pl.BlockSpec((1, 4 * out_features), lambda t: (0, 0)),             # bias (f32)
    ]
    out_specs = (
        pl.BlockSpec((1, B, out_features), lambda t: (t, 0, 0)),   # h_t per step
        pl.BlockSpec((B, out_features), lambda t: (0, 0)),         # final h (carry)
        pl.BlockSpec((B, out_features), lambda t: (0, 0)),         # final c (carry)
    )

    h_seq, h_fin, c_fin = pl.pallas_call(
        _lstm_seq_kernel,
        out_shape=(jax.ShapeDtypeStruct((T, B, out_features), jnp.float32),
                   jax.ShapeDtypeStruct((B, out_features), jnp.float32),
                   jax.ShapeDtypeStruct((B, out_features), jnp.float32)),
        grid=grid,
        in_specs=in_specs,
        out_specs=out_specs,
        compiler_params=pltpu.CompilerParams(
            dimension_semantics=("arbitrary",),     # recurrence over t
            vmem_limit_bytes=budget),
    )(x_seq, h0, c0, wx2, wh2, b2)
    return h_seq, h_fin, c_fin


# --------------------------------------------------------------------------
# Params + pure-JAX references
# --------------------------------------------------------------------------

def init_params(key, in_features, out_features, dtype=jnp.bfloat16):
    """nn.Linear-style init (uniform +/- 1/sqrt(in_count)) for the 4 gates,
    stacked and transposed so kernels compute xh @ W[g].  bf16 weights are the
    default streaming path (f32 accumulation preserved); bias stays f32."""
    in_count = in_features + out_features
    bound = 1.0 / float(in_count) ** 0.5
    k_w, k_b = jax.random.split(key, 2)
    w = jax.random.uniform(k_w, (4, in_count, out_features),
                           minval=-bound, maxval=bound, dtype=jnp.float32)
    b = jax.random.uniform(k_b, (4, out_features),
                           minval=-bound, maxval=bound, dtype=jnp.float32)
    return w.astype(dtype), b


def lstm_cell_reference(x, h, c, w, b):
    """Pure-JAX reference of the module forward (weight-dtype matmul inputs,
    f32 accumulation, f32 bias and state math)."""
    xh = jnp.concatenate([x, h], axis=1).astype(w.dtype)
    pre = [jnp.dot(xh, w[g], preferred_element_type=jnp.float32)
           + b[g].astype(jnp.float32) for g in range(4)]
    f = jax.nn.sigmoid(pre[0])
    u = jax.nn.sigmoid(pre[1])
    cc = jnp.tanh(pre[2])
    o = jax.nn.sigmoid(pre[3])
    c_new = f * c.astype(jnp.float32) + u * cc
    h_new = jnp.tanh(c_new) * o
    return h_new, c_new


def lstm_sequence_reference(x_seq, h0, c0, w, b):
    def step(carry, x_t):
        h, c = carry
        h_new, c_new = lstm_cell_reference(x_t, h, c, w, b)
        return (h_new, c_new), h_new
    (h_fin, c_fin), h_seq = jax.lax.scan(
        step, (h0.astype(jnp.float32), c0.astype(jnp.float32)), x_seq)
    return h_seq, h_fin, c_fin


# --------------------------------------------------------------------------
# Demo / self-test
# --------------------------------------------------------------------------

if __name__ == "__main__":
    in_features = 64
    out_features = 256        # multiple of 128 -> lane-dense tiles, grid of 2
    batch = 8
    seq_len = 8

    key = jax.random.PRNGKey(0)
    k_x, k_h, k_c, k_p, k_xs = jax.random.split(key, 5)

    x = jax.random.normal(k_x, (batch, in_features), dtype=jnp.float32)
    h = jax.random.normal(k_h, (batch, out_features), dtype=jnp.float32)
    c = jax.random.normal(k_c, (batch, out_features), dtype=jnp.float32)

    # --- single-step cell, f32 weights: exact module semantics ---
    w32, b32 = init_params(k_p, in_features, out_features, dtype=jnp.float32)
    h_new, c_new = lstm_forward(x, h, c, w32, b32)
    jax.block_until_ready((h_new, c_new))
    h_ref, c_ref = lstm_cell_reference(x, h, c, w32, b32)
    assert jnp.allclose(h_new, h_ref, atol=1e-5, rtol=1e-5)
    assert jnp.allclose(c_new, c_ref, atol=1e-5, rtol=1e-5)

    # --- single-step cell, bf16 weight streaming (default param dtype) ---
    w16, b16 = init_params(k_p, in_features, out_features)   # bf16 w, f32 b
    h_bf, c_bf = lstm_forward(x, h, c, w16, b16, out_dtype=jnp.float32)
    jax.block_until_ready((h_bf, c_bf))
    h_rbf, c_rbf = lstm_cell_reference(x, h, c, w16, b16)
    assert jnp.allclose(h_bf, h_rbf, atol=2e-2, rtol=2e-2)
    assert jnp.allclose(c_bf, c_rbf, atol=2e-2, rtol=2e-2)

    # --- sequence: in-kernel time loop, weights VMEM-resident across steps ---
    x_seq = jax.random.normal(k_xs, (seq_len, batch, in_features),
                              dtype=jnp.float32)
    h_seq, h_fin, c_fin = lstm_sequence_forward(x_seq, h, c, w32, b32)
    jax.block_until_ready((h_seq, h_fin, c_fin))
    h_seq_r, h_fin_r, c_fin_r = lstm_sequence_reference(x_seq, h, c, w32, b32)
    assert jnp.allclose(h_seq, h_seq_r, atol=1e-4, rtol=1e-4)
    assert jnp.allclose(h_fin, h_fin_r, atol=1e-4, rtol=1e-4)
    assert jnp.allclose(c_fin, c_fin_r, atol=1e-4, rtol=1e-4)

    print("KERNEL_OK")
</pallas_src>

<mosaic_0001>
module attributes {stable_mosaic.version = 11 : i64} {
  func.func @_lstm_cell_kernel(%arg0: i32, %arg1: memref<8x320xf32, #tpu.memory_space<vmem>>, %arg2: memref<8x128xf32, #tpu.memory_space<vmem>>, %arg3: memref<4x320x128xf32, #tpu.memory_space<vmem>>, %arg4: memref<4x128xf32, #tpu.memory_space<vmem>>, %arg5: memref<8x128xf32, #tpu.memory_space<vmem>>, %arg6: memref<8x128xf32, #tpu.memory_space<vmem>>) attributes {dimension_semantics = [#tpu.dimension_semantics<parallel>], iteration_bounds = array<i64: 2>, scalar_prefetch = 0 : i64, scratch_operands = 0 : i64, tpu.core_type = #tpu.core_type<tc>, window_params = [{pipeline_mode = #tpu.pipeline_mode<synchronous>, transform_indices = @transform_0, window_bounds = array<i64: 8, 320>}, {transform_indices = @transform_1, window_bounds = array<i64: 8, 128>}, {transform_indices = @transform_2, window_bounds = array<i64: 4, 320, 128>}, {transform_indices = @transform_3, window_bounds = array<i64: 4, 128>}, {transform_indices = @transform_4, window_bounds = array<i64: 8, 128>}, {transform_indices = @transform_5, window_bounds = array<i64: 8, 128>}]} {
    %c0 = arith.constant 0 : index
    %c0_0 = arith.constant 0 : index
    %0 = vector.load %arg1[%c0, %c0_0] : memref<8x320xf32, #tpu.memory_space<vmem>>, vector<8x320xf32>
    %c0_1 = arith.constant 0 : index
    %c0_2 = arith.constant 0 : index
    %1 = vector.load %arg2[%c0_1, %c0_2] : memref<8x128xf32, #tpu.memory_space<vmem>>, vector<8x128xf32>
    %c0_3 = arith.constant 0 : index
    %c0_4 = arith.constant 0 : index
    %c0_5 = arith.constant 0 : index
    %2 = vector.load %arg3[%c0_3, %c0_4, %c0_5] : memref<4x320x128xf32, #tpu.memory_space<vmem>>, vector<1x320x128xf32>
    %3 = vector.shape_cast %2 : vector<1x320x128xf32> to vector<320x128xf32>
    %cst = arith.constant dense<0.000000e+00> : vector<8x128xf32>
    %4 = tpu.matmul %0, %3, %cst {dimension_numbers = #tpu.dot_dimension_numbers<[1], [0], [0], [1], [0, 0, 1, 1], [], []>} : vector<8x320xf32>, vector<320x128xf32>, vector<8x128xf32> -> vector<8x128xf32>
    %c0_6 = arith.constant 0 : index
    %c0_7 = arith.constant 0 : index
    %5 = vector.load %arg4[%c0_6, %c0_7] : memref<4x128xf32, #tpu.memory_space<vmem>>, vector<1x128xf32>
    %6 = vector.shape_cast %5 : vector<1x128xf32> to vector<128xf32>
    %7 = vector.shape_cast %6 : vector<128xf32> to vector<1x128xf32>
    %8 = vector.broadcast %7 : vector<1x128xf32> to vector<8x128xf32>
    %9 = arith.addf %4, %8 : vector<8x128xf32>
    %10 = arith.negf %9 : vector<8x128xf32>
    %11 = math.exp %10 : vector<8x128xf32>
    %cst_8 = arith.constant 1.000000e+00 : f32
    %12 = vector.broadcast %cst_8 : f32 to vector<8x128xf32>
    %13 = arith.addf %12, %11 : vector<8x128xf32>
    %14 = arith.divf %12, %13 : vector<8x128xf32>
    %c1 = arith.constant 1 : index
    %c0_9 = arith.constant 0 : index
    %c0_10 = arith.constant 0 : index
    %15 = vector.load %arg3[%c1, %c0_9, %c0_10] : memref<4x320x128xf32, #tpu.memory_space<vmem>>, vector<1x320x128xf32>
    %16 = vector.shape_cast %15 : vector<1x320x128xf32> to vector<320x128xf32>
    %cst_11 = arith.constant dense<0.000000e+00> : vector<8x128xf32>
    %17 = tpu.matmul %0, %16, %cst_11 {dimension_numbers = #tpu.dot_dimension_numbers<[1], [0], [0], [1], [0, 0, 1, 1], [], []>} : vector<8x320xf32>, vector<320x128xf32>, vector<8x128xf32> -> vector<8x128xf32>
    %c1_12 = arith.constant 1 : index
    %c0_13 = arith.constant 0 : index
    %18 = vector.load %arg4[%c1_12, %c0_13] : memref<4x128xf32, #tpu.memory_space<vmem>>, vector<1x128xf32>
    %19 = vector.shape_cast %18 : vector<1x128xf32> to vector<128xf32>
    %20 = vector.shape_cast %19 : vector<128xf32> to vector<1x128xf32>
    %21 = vector.broadcast %20 : vector<1x128xf32> to vector<8x128xf32>
    %22 = arith.addf %17, %21 : vector<8x128xf32>
    %23 = arith.negf %22 : vector<8x128xf32>
    %24 = math.exp %23 : vector<8x128xf32>
    %cst_14 = arith.constant 1.000000e+00 : f32
    %25 = vector.broadcast %cst_14 : f32 to vector<8x128xf32>
    %26 = arith.addf %25, %24 : vector<8x128xf32>
    %27 = arith.divf %25, %26 : vector<8x128xf32>
    %c2 = arith.constant 2 : index
    %c0_15 = arith.constant 0 : index
    %c0_16 = arith.constant 0 : index
    %28 = vector.load %arg3[%c2, %c0_15, %c0_16] : memref<4x320x128xf32, #tpu.memory_space<vmem>>, vector<1x320x128xf32>
    %29 = vector.shape_cast %28 : vector<1x320x128xf32> to vector<320x128xf32>
    %cst_17 = arith.constant dense<0.000000e+00> : vector<8x128xf32>
    %30 = tpu.matmul %0, %29, %cst_17 {dimension_numbers = #tpu.dot_dimension_numbers<[1], [0], [0], [1], [0, 0, 1, 1], [], []>} : vector<8x320xf32>, vector<320x128xf32>, vector<8x128xf32> -> vector<8x128xf32>
    %c2_18 = arith.constant 2 : index
    %c0_19 = arith.constant 0 : index
    %31 = vector.load %arg4[%c2_18, %c0_19] : memref<4x128xf32, #tpu.memory_space<vmem>>, vector<1x128xf32>
    %32 = vector.shape_cast %31 : vector<1x128xf32> to vector<128xf32>
    %33 = vector.shape_cast %32 : vector<128xf32> to vector<1x128xf32>
    %34 = vector.broadcast %33 : vector<1x128xf32> to vector<8x128xf32>
    %35 = arith.addf %30, %34 : vector<8x128xf32>
    %36 = math.tanh %35 : vector<8x128xf32>
    %c3 = arith.constant 3 : index
    %c0_20 = arith.constant 0 : index
    %c0_21 = arith.constant 0 : index
    %37 = vector.load %arg3[%c3, %c0_20, %c0_21] : memref<4x320x128xf32, #tpu.memory_space<vmem>>, vector<1x320x128xf32>
    %38 = vector.shape_cast %37 : vector<1x320x128xf32> to vector<320x128xf32>
    %cst_22 = arith.constant dense<0.000000e+00> : vector<8x128xf32>
    %39 = tpu.matmul %0, %38, %cst_22 {dimension_numbers = #tpu.dot_dimension_numbers<[1], [0], [0], [1], [0, 0, 1, 1], [], []>} : vector<8x320xf32>, vector<320x128xf32>, vector<8x128xf32> -> vector<8x128xf32>
    %c3_23 = arith.constant 3 : index
    %c0_24 = arith.constant 0 : index
    %40 = vector.load %arg4[%c3_23, %c0_24] : memref<4x128xf32, #tpu.memory_space<vmem>>, vector<1x128xf32>
    %41 = vector.shape_cast %40 : vector<1x128xf32> to vector<128xf32>
    %42 = vector.shape_cast %41 : vector<128xf32> to vector<1x128xf32>
    %43 = vector.broadcast %42 : vector<1x128xf32> to vector<8x128xf32>
    %44 = arith.addf %39, %43 : vector<8x128xf32>
    %45 = arith.negf %44 : vector<8x128xf32>
    %46 = math.exp %45 : vector<8x128xf32>
    %cst_25 = arith.constant 1.000000e+00 : f32
    %47 = vector.broadcast %cst_25 : f32 to vector<8x128xf32>
    %48 = arith.addf %47, %46 : vector<8x128xf32>
    %49 = arith.divf %47, %48 : vector<8x128xf32>
    %50 = arith.mulf %14, %1 : vector<8x128xf32>
    %51 = arith.mulf %27, %36 : vector<8x128xf32>
    %52 = arith.addf %50, %51 : vector<8x128xf32>
    %53 = math.tanh %52 : vector<8x128xf32>
    %54 = arith.mulf %53, %49 : vector<8x128xf32>
    %c0_26 = arith.constant 0 : index
    %c0_27 = arith.constant 0 : index
    %55 = vector.load %arg5[%c0_26, %c0_27] : memref<8x128xf32, #tpu.memory_space<vmem>>, vector<8x128xf32>
    tpu.vector_store %arg5[%c0_26, %c0_27], %54 {strides = array<i32>} : memref<8x128xf32, #tpu.memory_space<vmem>>, vector<8x128xf32>,
    %c0_28 = arith.constant 0 : index
    %c0_29 = arith.constant 0 : index
    %56 = vector.load %arg6[%c0_28, %c0_29] : memref<8x128xf32, #tpu.memory_space<vmem>>, vector<8x128xf32>
    tpu.vector_store %arg6[%c0_28, %c0_29], %52 {strides = array<i32>} : memref<8x128xf32, #tpu.memory_space<vmem>>, vector<8x128xf32>,
    return
  }
  func.func @transform_0(%arg0: i32) -> (i32, i32) {
    %c0_i32 = arith.constant 0 : i32
    %c0_i32_0 = arith.constant 0 : i32
    %c0_i32_1 = arith.constant 0 : i32
    return %c0_i32, %c0_i32_0 : i32, i32
  }
  func.func @transform_1(%arg0: i32) -> (i32, i32) {
    %c0_i32 = arith.constant 0 : i32
    %c0_i32_0 = arith.constant 0 : i32
    return %c0_i32, %arg0 : i32, i32
  }
  func.func @transform_2(%arg0: i32) -> (i32, i32, i32) {
    %c0_i32 = arith.constant 0 : i32
    %c0_i32_0 = arith.constant 0 : i32
    %c0_i32_1 = arith.constant 0 : i32
    return %c0_i32, %c0_i32_0, %arg0 : i32, i32, i32
  }
  func.func @transform_3(%arg0: i32) -> (i32, i32) {
    %c0_i32 = arith.constant 0 : i32
    %c0_i32_0 = arith.constant 0 : i32
    return %c0_i32, %arg0 : i32, i32
  }
  func.func @transform_4(%arg0: i32) -> (i32, i32) {
    %c0_i32 = arith.constant 0 : i32
    %c0_i32_0 = arith.constant 0 : i32
    return %c0_i32, %arg0 : i32, i32
  }
  func.func @transform_5(%arg0: i32) -> (i32, i32) {
    %c0_i32 = arith.constant 0 : i32
    %c0_i32_0 = arith.constant 0 : i32
    return %c0_i32, %arg0 : i32, i32
  }
}

</mosaic_0001>

<llo_original>
// kernel: tpu_custom_call.1
$region0: #{tpu_custom_call.1}
  #allocation0 [shape = 'u32[]', space=smem, size = 0x4, offset = 0x4, fixed_abs, tag = 'smem constant byte address 0x4 - core index']
  #allocation1 [shape = 'u32[72,128]{1,0:T(1,128)}', space=vmem, size = 0x9000, scoped, tag = 'internal scratch']
  %s0 = inlined_call_operand.hbm [shape: f32[8,320], index: 0, kind: input, shape index: {}]
  %s1 = inlined_call_operand.hbm [shape: f32[8,256], index: 1, kind: input, shape index: {}]
  %s2 = inlined_call_operand.hbm [shape: f32[4,320,256], index: 2, kind: input, shape index: {}]
  %s3 = inlined_call_operand.hbm [shape: f32[4,256], index: 3, kind: input, shape index: {}]
  %s4 = inlined_call_operand.hbm [shape: f32[8,256], index: 4, kind: output, shape index: {0}]
  %s5 = inlined_call_operand.hbm [shape: f32[8,256], index: 5, kind: output, shape index: {1}]
  %6 = xla_tuple %s4, %s5
  %s7 = sld [smem:[#allocation0]]
  $region73: #{tpu_custom_call.1} parent=0
    _
  %s9 = ssub.s32 1, %s7
  %s10 = scalar_select 0, %s9, %s7
  $region1: #{tpu_custom_call.1} parent=0
    #allocation2 [shape = 'u8[12288]{0}', space=vmem, size = 0x3000, scoped, tag = 'input window, operand 0, single buffered']
    #allocation3 [shape = 's32[2]{0}', space=sflag, size = 0x8, scoped, tag = 'scoped memory for tpu_custom_call.1']
    #allocation4 [shape = 's32[2]{0}', space=sflag, size = 0x8, scoped, tag = 'scoped memory for tpu_custom_call.1']
    #allocation5 [shape = 'u8[8192]{0}', space=vmem, size = 0x2000, scoped, tag = 'input window, operand 1']
    #allocation6 [shape = 's32[2]{0}', space=sflag, size = 0x8, scoped, tag = 'scoped memory for tpu_custom_call.1']
    #allocation7 [shape = 'u8[1310720]{0}', space=vmem, size = 0x140000, scoped, tag = 'input window, operand 2']
    #allocation8 [shape = 'u8[4096]{0}', space=vmem, size = 0x1000, scoped, tag = 'input window, operand 3']
    #allocation9 [shape = 's32[2]{0}', space=sflag, size = 0x8, scoped, tag = 'scoped memory for tpu_custom_call.1']
    #allocation10 [shape = 'u8[8192]{0}', space=vmem, size = 0x2000, scoped, tag = 'output window, operand 0']
    #allocation11 [shape = 'u8[8192]{0}', space=vmem, size = 0x2000, scoped, tag = 'output window, operand 1']
    #allocation12 [shape = 's32[2]{0}', space=sflag, size = 0x8, scoped, tag = 'scoped memory for tpu_custom_call.1']
    %11 = vsyncpa [#allocation3], 0
    %12 = vsyncpa [#allocation6], 0
    %s13 = scalar_lea.sflag [#allocation6], 1
    %14 = vsyncpa %s13, 0
    %15 = vsyncpa [#allocation9], 0
    %s16 = scalar_lea.sflag [#allocation9], 1
    %17 = vsyncpa %s16, 0
    %18 = vsyncpa [#allocation4], 0
    %s19 = scalar_lea.sflag [#allocation4], 1
    %20 = vsyncpa %s19, 0
    %21 = vsyncpa [#allocation12], 0
    %s22 = scalar_lea.sflag [#allocation12], 1
    %23 = vsyncpa %s22, 0
    loop: start=0, step=1, limit=4
    $region2: #{tpu_custom_call.1} parent=1 // loop_pre_header
      _
    $region3: #{tpu_custom_call.1} parent=1 // loop_header
      %s25 = sphi 0, %s29
      %p26 = scmp.ge.s32.totalorder %s25, 4
      %s33 = sphi 0, %s33
      %s35 = sphi 0, %s33
      %s36 = sphi 0, %s35
      %s50 = sphi 0, %s36
      %s56 = sphi 0, %s58
      %s59 = sphi 0, %s56
      %s60 = sphi 0, %s59
      %s76 = sphi 0, %s60
      %s82 = sphi 0, %s84
      %s85 = sphi 0, %s82
      %s86 = sphi 0, %s85
      %s102 = sphi 0, %s86
      %s108 = sphi 0, %s110
      %s111 = sphi 0, %s108
      %s112 = sphi 0, %s111
      %s128 = sphi 0, %s112
      %s134 = sphi 0, %s136
      %s137 = sphi 0, %s134
      %s138 = sphi 0, %s137
      %s154 = sphi 0, %s138
      %s160 = sphi 0, %s162
      %s163 = sphi 0, %s160
      %s164 = sphi 0, %s163
      %s180 = sphi 0, %s164
    $region4: #{tpu_custom_call.1} parent=1 // loop_header_branch
      %28 = sbr.rel (%p26) target = $region8
    $region5: #{tpu_custom_call.1} parent=1 // loop_body
      %s30 = ssub.s32 %s25, 1
      %s31 = ssub.s32 %s25, 2
      %s32 = sadd.s32 %s25, 1
      %s34 = sadd.s32 %s33, 1
      %p37 = scmp.eq.s32.totalorder %s25, 1
      %p38 = scmp.ne.s32.totalorder %s33, %s35
      %p39 = scmp.eq.s32.totalorder %s25, 0
      %p40 = por %p38, %p39
      %p41 = scmp.ne.s32.totalorder %s33, %s35
      %p42 = scmp.eq.s32.totalorder %s30, 1
      %p43 = por %p41, %p42
      %p44 = scmp.ne.s32.totalorder %s35, %s36
      %p45 = scmp.eq.s32.totalorder %s30, 0
      %p46 = por %p44, %p45
      %p47 = scmp.ne.s32.totalorder %s35, %s36
      %p48 = scmp.eq.s32.totalorder %s31, 1
      %p49 = por %p47, %p48
      %p51 = scmp.ne.s32.totalorder %s36, %s50
      %p52 = scmp.eq.s32.totalorder %s31, 0
      %p53 = por %p51, %p52
      %s54 = ssub.s32 %s25, %s32
      %p55 = scmp.eq.s32.totalorder %s54, 0
      %s57 = sadd.s32 %s56, 1
      %s58 = scalar_select %p55, %s56, %s57
      %p61 = pneg %p55
      %p62 = scmp.eq.s32.totalorder %s25, 1
      %p63 = por %p61, %p62
      %p64 = scmp.ne.s32.totalorder %s56, %s59
      %p65 = scmp.eq.s32.totalorder %s25, 0
      %p66 = por %p64, %p65
      %p67 = scmp.ne.s32.totalorder %s56, %s59
      %p68 = scmp.eq.s32.totalorder %s30, 1
      %p69 = por %p67, %p68
      %p70 = scmp.ne.s32.totalorder %s59, %s60
      %p71 = scmp.eq.s32.totalorder %s30, 0
      %p72 = por %p70, %p71
      %p73 = scmp.ne.s32.totalorder %s59, %s60
      %p74 = scmp.eq.s32.totalorder %s31, 1
      %p75 = por %p73, %p74
      %p77 = scmp.ne.s32.totalorder %s60, %s76
      %p78 = scmp.eq.s32.totalorder %s31, 0
      %p79 = por %p77, %p78
      %s80 = ssub.s32 %s25, %s32
      %p81 = scmp.eq.s32.totalorder %s80, 0
      %s83 = sadd.s32 %s82, 1
      %s84 = scalar_select %p81, %s82, %s83
      %p87 = pneg %p81
      %p88 = scmp.eq.s32.totalorder %s25, 1
      %p89 = por %p87, %p88
      %p90 = scmp.ne.s32.totalorder %s82, %s85
      %p91 = scmp.eq.s32.totalorder %s25, 0
      %p92 = por %p90, %p91
      %p93 = scmp.ne.s32.totalorder %s82, %s85
      %p94 = scmp.eq.s32.totalorder %s30, 1
      %p95 = por %p93, %p94
      %p96 = scmp.ne.s32.totalorder %s85, %s86
      %p97 = scmp.eq.s32.totalorder %s30, 0
      %p98 = por %p96, %p97
      %p99 = scmp.ne.s32.totalorder %s85, %s86
      %p100 = scmp.eq.s32.totalorder %s31, 1
      %p101 = por %p99, %p100
      %p103 = scmp.ne.s32.totalorder %s86, %s102
      %p104 = scmp.eq.s32.totalorder %s31, 0
      %p105 = por %p103, %p104
      %s106 = ssub.s32 %s25, %s32
      %p107 = scmp.eq.s32.totalorder %s106, 0
      %s109 = sadd.s32 %s108, 1
      %s110 = scalar_select %p107, %s108, %s109
      %p113 = pneg %p107
      %p114 = scmp.eq.s32.totalorder %s25, 1
      %p115 = por %p113, %p114
      %p116 = scmp.ne.s32.totalorder %s108, %s111
      %p117 = scmp.eq.s32.totalorder %s25, 0
      %p118 = por %p116, %p117
      %p119 = scmp.ne.s32.totalorder %s108, %s111
      %p120 = scmp.eq.s32.totalorder %s30, 1
      %p121 = por %p119, %p120
      %p122 = scmp.ne.s32.totalorder %s111, %s112
      %p123 = scmp.eq.s32.totalorder %s30, 0
      %p124 = por %p122, %p123
      %p125 = scmp.ne.s32.totalorder %s111, %s112
      %p126 = scmp.eq.s32.totalorder %s31, 1
      %p127 = por %p125, %p126
      %p129 = scmp.ne.s32.totalorder %s112, %s128
      %p130 = scmp.eq.s32.totalorder %s31, 0
      %p131 = por %p129, %p130
      %s132 = ssub.s32 %s25, %s32
      %p133 = scmp.eq.s32.totalorder %s132, 0
      %s135 = sadd.s32 %s134, 1
      %s136 = scalar_select %p133, %s134, %s135
      %p139 = pneg %p133
      %p140 = scmp.eq.s32.totalorder %s25, 1
      %p141 = por %p139, %p140
      %p142 = scmp.ne.s32.totalorder %s134, %s137
      %p143 = scmp.eq.s32.totalorder %s25, 0
      %p144 = por %p142, %p143
      %p145 = scmp.ne.s32.totalorder %s134, %s137
      %p146 = scmp.eq.s32.totalorder %s30, 1
      %p147 = por %p145, %p146
      %p148 = scmp.ne.s32.totalorder %s137, %s138
      %p149 = scmp.eq.s32.totalorder %s30, 0
      %p150 = por %p148, %p149
      %p151 = scmp.ne.s32.totalorder %s137, %s138
      %p152 = scmp.eq.s32.totalorder %s31, 1
      %p153 = por %p151, %p152
      %p155 = scmp.ne.s32.totalorder %s138, %s154
      %p156 = scmp.eq.s32.totalorder %s31, 0
      %p157 = por %p155, %p156
      %s158 = ssub.s32 %s25, %s32
      %p159 = scmp.eq.s32.totalorder %s158, 0
      %s161 = sadd.s32 %s160, 1
      %s162 = scalar_select %p159, %s160, %s161
      %p165 = pneg %p159
      %p166 = scmp.eq.s32.totalorder %s25, 1
      %p167 = por %p165, %p166
      %p168 = scmp.ne.s32.totalorder %s160, %s163
      %p169 = scmp.eq.s32.totalorder %s25, 0
      %p170 = por %p168, %p169
      %p171 = scmp.ne.s32.totalorder %s160, %s163
      %p172 = scmp.eq.s32.totalorder %s30, 1
      %p173 = por %p171, %p172
      %p174 = scmp.ne.s32.totalorder %s163, %s164
      %p175 = scmp.eq.s32.totalorder %s30, 0
      %p176 = por %p174, %p175
      %p177 = scmp.ne.s32.totalorder %s163, %s164
      %p178 = scmp.eq.s32.totalorder %s31, 1
      %p179 = por %p177, %p178
      %p181 = scmp.ne.s32.totalorder %s164, %s180
      %p182 = scmp.eq.s32.totalorder %s31, 0
      %p183 = por %p181, %p182
      %p184 = scmp.le.s32.totalorder 1, %s25
      %p185 = scmp.lt.s32.totalorder %s25, 3
      %p186 = pnand %p184, %p185
      %p187 = pneg %p186
      // Predicated region
      $region9: #{tpu_custom_call.1} parent=5 // pred_check
        _
      $region10: #{tpu_custom_call.1} parent=5 // pred_check_branch
        %189 = sbr.rel (%p186) target = $region12
      $region11: #{tpu_custom_call.1} parent=5 // pred_region
        %s190 = ssub.s32 %s25, 1
        // Predicated region
        $region13: #{tpu_custom_call.1} parent=11 // pred_check
          %p191 = pneg %p46
        $region14: #{tpu_custom_call.1} parent=11 // pred_check_branch
          %193 = sbr.rel (%p191) target = $region16
        $region15: #{tpu_custom_call.1} parent=11 // pred_region
          %195 = vsyncadd [#allocation3], 0
          %s197 = sshll.u32 %s0, 4
          %s198 = int_to_ptr.hbm [resolvable:$true] %s197
          %s199 = sshll.u32 [#allocation2], 4
          %s200 = int_to_ptr.vmem [resolvable:$true] %s199
          %202 = dma.hbm_to_vmem [thread:$0]  %s198, 384, %s200, [#allocation3]
        $region16: #{tpu_custom_call.1} parent=11 // pred_fallthru
          _
      $region12: #{tpu_custom_call.1} parent=5 // pred_fallthru
        _
      %p203 = scmp.lt.s32.totalorder %s25, 2
      // Predicated region
      $region17: #{tpu_custom_call.1} parent=5 // pred_check
        %p204 = pneg %p203
      $region18: #{tpu_custom_call.1} parent=5 // pred_check_branch
        %206 = sbr.rel (%p204) target = $region20
      $region19: #{tpu_custom_call.1} parent=5 // pred_region
        // Predicated region
        $region21: #{tpu_custom_call.1} parent=19 // pred_check
          %p207 = pneg %p66
        $region22: #{tpu_custom_call.1} parent=19 // pred_check_branch
          %209 = sbr.rel (%p207) target = $region24
        $region23: #{tpu_custom_call.1} parent=19 // pred_region
          %s210 = sand.u32 %s25, 1
          %s211 = scalar_lea.sflag [#allocation6], %s210
          %s212 = sand.u32 %s56, 1
          %s213 = smul.addr %s212, 8
          %s214 = scalar_lea.vmem [#allocation5], %s213
          %216 = vsyncadd %s211, 0
          %s217 = smul.addr %s25, 8
          %s218 = scalar_lea.hbm %s1, %s217
          %s220 = sshll.u32 %s218, 4
          %s221 = int_to_ptr.hbm [resolvable:$true] %s220
          %s222 = sshll.u32 %s214, 4
          %s223 = int_to_ptr.vmem [resolvable:$true] %s222
          %225 = dma.hbm_to_vmem [thread:$0]  %s221, 128, %s223, %s211
        $region24: #{tpu_custom_call.1} parent=19 // pred_fallthru
          _
        // Predicated region
        $region25: #{tpu_custom_call.1} parent=19 // pred_check
          %p226 = pneg %p92
        $region26: #{tpu_custom_call.1} parent=19 // pred_check_branch
          %228 = sbr.rel (%p226) target = $region28
        $region27: #{tpu_custom_call.1} parent=19 // pred_region
          %s229 = sand.u32 %s25, 1
          %s230 = scalar_lea.sflag [#allocation6], %s229
          %s231 = sand.u32 %s82, 1
          %s232 = smul.addr %s231, 1280
          %s233 = scalar_lea.vmem [#allocation7], %s232
          %235 = vsyncadd %s230, 0
          %s236 = smul.addr %s25, 8
          %s237 = scalar_lea.hbm %s2, %s236
          %s238 = sshll.u32 %s237, 4
          %s239 = int_to_ptr.hbm [resolvable:$true] %s238
          %s240 = sshll.u32 %s233, 4
          %s241 = int_to_ptr.vmem [resolvable:$true] %s240
          %246 = dma.hbm_to_vmem [thread:$0]  %s239, 20480, %s241, %s230, 256, 128, 8
        $region28: #{tpu_custom_call.1} parent=19 // pred_fallthru
          _
        // Predicated region
        $region29: #{tpu_custom_call.1} parent=19 // pred_check
          %p247 = pneg %p118
        $region30: #{tpu_custom_call.1} parent=19 // pred_check_branch
          %249 = sbr.rel (%p247) target = $region32
        $region31: #{tpu_custom_call.1} parent=19 // pred_region
          %s250 = sand.u32 %s108, 1
          %s251 = scalar_lea.sflag [#allocation9], %s250
          %s252 = sand.u32 %s108, 1
          %s253 = smul.addr %s252, 4
          %s254 = scalar_lea.vmem [#allocation8], %s253
          %256 = vsyncadd %s251, 0
          %s257 = smul.addr %s25, 4
          %s258 = scalar_lea.hbm %s3, %s257
          %s260 = sshll.u32 %s258, 4
          %s261 = int_to_ptr.hbm [resolvable:$true] %s260
          %s262 = sshll.u32 %s254, 4
          %s263 = int_to_ptr.vmem [resolvable:$true] %s262
          %265 = dma.hbm_to_vmem [thread:$0]  %s261, 64, %s263, %s251
        $region32: #{tpu_custom_call.1} parent=19 // pred_fallthru
          _
      $region20: #{tpu_custom_call.1} parent=5 // pred_fallthru
        _
      %p266 = scmp.le.s32.totalorder 1, %s25
      %p267 = scmp.lt.s32.totalorder %s25, 3
      %p268 = pnand %p266, %p267
      %p269 = pneg %p268
      // Predicated region
      $region33: #{tpu_custom_call.1} parent=5 // pred_check
        _
      $region34: #{tpu_custom_call.1} parent=5 // pred_check_branch
        %271 = sbr.rel (%p268) target = $region36
      $region35: #{tpu_custom_call.1} parent=5 // pred_region
        %s272 = ssub.s32 %s25, 1
        // Predicated region
        $region37: #{tpu_custom_call.1} parent=35 // pred_check
          %p273 = pneg %p46
        $region38: #{tpu_custom_call.1} parent=35 // pred_check_branch
          %275 = sbr.rel (%p273) target = $region40
        $region39: #{tpu_custom_call.1} parent=35 // pred_region
          %277 = dma.done [#allocation3], 384
        $region40: #{tpu_custom_call.1} parent=35 // pred_fallthru
          _
        %s278 = sand.u32 %s30, 1
        %s279 = scalar_lea.sflag [#allocation6], %s278
        %s280 = sand.u32 %s59, 1
        %s281 = smul.addr %s280, 8
        %s282 = scalar_lea.vmem [#allocation5], %s281
        // Predicated region
        $region41: #{tpu_custom_call.1} parent=35 // pred_check
          %p283 = pneg %p72
        $region42: #{tpu_custom_call.1} parent=35 // pred_check_branch
          %285 = sbr.rel (%p283) target = $region44
        $region43: #{tpu_custom_call.1} parent=35 // pred_region
          %287 = dma.done %s279, 128
        $region44: #{tpu_custom_call.1} parent=35 // pred_fallthru
          _
        %s288 = sand.u32 %s30, 1
        %s289 = scalar_lea.sflag [#allocation6], %s288
        %s290 = sand.u32 %s85, 1
        %s291 = smul.addr %s290, 1280
        %s292 = scalar_lea.vmem [#allocation7], %s291
        // Predicated region
        $region45: #{tpu_custom_call.1} parent=35 // pred_check
          %p293 = pneg %p98
        $region46: #{tpu_custom_call.1} parent=35 // pred_check_branch
          %295 = sbr.rel (%p293) target = $region48
        $region47: #{tpu_custom_call.1} parent=35 // pred_region
          %297 = dma.done %s289, 20480
        $region48: #{tpu_custom_call.1} parent=35 // pred_fallthru
          _
        %s298 = sand.u32 %s111, 1
        %s299 = scalar_lea.sflag [#allocation9], %s298
        %s300 = sand.u32 %s111, 1
        %s301 = smul.addr %s300, 4
        %s302 = scalar_lea.vmem [#allocation8], %s301
        // Predicated region
        $region49: #{tpu_custom_call.1} parent=35 // pred_check
          %p303 = pneg %p124
        $region50: #{tpu_custom_call.1} parent=35 // pred_check_branch
          %305 = sbr.rel (%p303) target = $region52
        $region51: #{tpu_custom_call.1} parent=35 // pred_region
          %307 = dma.done %s299, 64
        $region52: #{tpu_custom_call.1} parent=35 // pred_fallthru
          _
        %p308 = pneg %p46
        %p309 = pneg %p43
        %s310 = sand.u32 %s30, 1
        %s311 = scalar_lea.sflag [#allocation6], %s310
        %s312 = sand.u32 %s59, 1
        %s313 = smul.addr %s312, 8
        %s314 = scalar_lea.vmem [#allocation5], %s313
        %p315 = pneg %p72
        %p316 = pneg %p69
        %s317 = sand.u32 %s30, 1
        %s318 = scalar_lea.sflag [#allocation6], %s317
        %s319 = sand.u32 %s85, 1
        %s320 = smul.addr %s319, 1280
        %s321 = scalar_lea.vmem [#allocation7], %s320
        %p322 = pneg %p98
        %p323 = pneg %p95
        %s324 = sand.u32 %s111, 1
        %s325 = scalar_lea.sflag [#allocation9], %s324
        %s326 = sand.u32 %s111, 1
        %s327 = smul.addr %s326, 4
        %s328 = scalar_lea.vmem [#allocation8], %s327
        %p329 = pneg %p124
        %p330 = pneg %p121
        %p331 = pneg %p150
        %p332 = pneg %p147
        %s333 = sand.u32 %s137, 1
        %s334 = scalar_lea.sflag [#allocation4], %s333
        %s335 = sand.u32 %s137, 1
        %s336 = smul.addr %s335, 8
        %s337 = scalar_lea.vmem [#allocation10], %s336
        %p338 = pneg %p176
        %p339 = pneg %p173
        %s340 = sand.u32 %s163, 1
        %s341 = scalar_lea.sflag [#allocation12], %s340
        %s342 = sand.u32 %s163, 1
        %s343 = smul.addr %s342, 8
        %s344 = scalar_lea.vmem [#allocation11], %s343
        %v345 = vld [vmem:[#allocation2] sm:$0xff]
        %v346 = vld [vmem:[#allocation2 + $0x8] sm:$0xff]
        %v347 = vld [vmem:[#allocation2 + $0x10] sm:$0xff]
        %v348 = vld [vmem:[%s282] sm:$0xff]
        %v349 = vld [vmem:[%s292] sm:$0xff]
        %v350 = vld [vmem:[%s292 + $0x8] sm:$0xff]
        %v351 = vld [vmem:[%s292 + $0x10] sm:$0xff]
        %v352 = vld [vmem:[%s292 + $0x18] sm:$0xff]
        %v353 = vld [vmem:[%s292 + $0x20] sm:$0xff]
        %v354 = vld [vmem:[%s292 + $0x28] sm:$0xff]
        %v355 = vld [vmem:[%s292 + $0x30] sm:$0xff]
        %v356 = vld [vmem:[%s292 + $0x38] sm:$0xff]
        %v357 = vld [vmem:[%s292 + $0x40] sm:$0xff]
        %v358 = vld [vmem:[%s292 + $0x48] sm:$0xff]
        %v359 = vld [vmem:[%s292 + $0x50] sm:$0xff]
        %v360 = vld [vmem:[%s292 + $0x58] sm:$0xff]
        %v361 = vld [vmem:[%s292 + $0x60] sm:$0xff]
        %v362 = vld [vmem:[%s292 + $0x68] sm:$0xff]
        %v363 = vld [vmem:[%s292 + $0x70] sm:$0xff]
        %v364 = vld [vmem:[%s292 + $0x78] sm:$0xff]
        %v365 = vld [vmem:[%s292 + $0x80] sm:$0xff]
        %v366 = vld [vmem:[%s292 + $0x88] sm:$0xff]
        %v367 = vld [vmem:[%s292 + $0x90] sm:$0xff]
        %v368 = vld [vmem:[%s292 + $0x98] sm:$0xff]
        %v369 = vld [vmem:[%s292 + $0xa0] sm:$0xff]
        %v370 = vld [vmem:[%s292 + $0xa8] sm:$0xff]
        %v371 = vld [vmem:[%s292 + $0xb0] sm:$0xff]
        %v372 = vld [vmem:[%s292 + $0xb8] sm:$0xff]
        %v373 = vld [vmem:[%s292 + $0xc0] sm:$0xff]
        %v374 = vld [vmem:[%s292 + $0xc8] sm:$0xff]
        %v375 = vld [vmem:[%s292 + $0xd0] sm:$0xff]
        %v376 = vld [vmem:[%s292 + $0xd8] sm:$0xff]
        %v377 = vld [vmem:[%s292 + $0xe0] sm:$0xff]
        %v378 = vld [vmem:[%s292 + $0xe8] sm:$0xff]
        %v379 = vld [vmem:[%s292 + $0xf0] sm:$0xff]
        %v380 = vld [vmem:[%s292 + $0xf8] sm:$0xff]
        %v381 = vld [vmem:[%s292 + $0x100] sm:$0xff]
        %v382 = vld [vmem:[%s292 + $0x108] sm:$0xff]
        %v383 = vld [vmem:[%s292 + $0x110] sm:$0xff]
        %v384 = vld [vmem:[%s292 + $0x118] sm:$0xff]
        %v385 = vld [vmem:[%s292 + $0x120] sm:$0xff]
        %v386 = vld [vmem:[%s292 + $0x128] sm:$0xff]
        %v387 = vld [vmem:[%s292 + $0x130] sm:$0xff]
        %v388 = vld [vmem:[%s292 + $0x138] sm:$0xff]
        %v389 = vld [vmem:[%s302] sm:$0x1]
        %v390 = vperm.slane %v389, 0
        %vm391 = vcmask 523264
        %v393 = vsel %vm391, %v347, 0
        %395 = vmatpush.msra.mxu0 %v364
        %396 = vmatpush.msra.mxu0 %v363
        %397 = vmatpush.msra.mxu0 %v362
        %398 = vmatpush.msra.mxu0 %v361
        %399 = vmatpush.msra.mxu0 %v360
        %400 = vmatpush.msra.mxu0 %v359
        %401 = vmatpush.msra.mxu0 %v358
        %402 = vmatpush.msra.mxu0 %v357
        %403 = vmatpush.msra.mxu0 %v356
        %404 = vmatpush.msra.mxu0 %v355
        %405 = vmatpush.msra.mxu0 %v354
        %406 = vmatpush.msra.mxu0 %v353
        %407 = vmatpush.msra.mxu0 %v352
        %408 = vmatpush.msra.mxu0 %v351
        %409 = vmatpush.msra.mxu0 %v350
        %410 = vmatpush.msra.mxu0 %v349
        %411 = vmatmul.f32.gmra.mxu0 %v345
        %v412 = vpop.f32.mrf.mxu0
        %v413 = vadd.f32 %v390, %v412
        %414 = vdwg.mxu0
        %415 = vmatpush.msra.mxu0 %v380
        %416 = vmatpush.msra.mxu0 %v379
        %417 = vmatpush.msra.mxu0 %v378
        %418 = vmatpush.msra.mxu0 %v377
        %419 = vmatpush.msra.mxu0 %v376
        %420 = vmatpush.msra.mxu0 %v375
        %421 = vmatpush.msra.mxu0 %v374
        %422 = vmatpush.msra.mxu0 %v373
        %423 = vmatpush.msra.mxu0 %v372
        %424 = vmatpush.msra.mxu0 %v371
        %425 = vmatpush.msra.mxu0 %v370
        %426 = vmatpush.msra.mxu0 %v369
        %427 = vmatpush.msra.mxu0 %v368
        %428 = vmatpush.msra.mxu0 %v367
        %429 = vmatpush.msra.mxu0 %v366
        %430 = vmatpush.msra.mxu0 %v365
        %431 = vmatmul.f32.gmra.mxu0 %v346
        %v432 = vpop.f32.mrf.mxu0
        %v433 = vadd.f32 %v413, %v432
        %434 = vdwg.mxu0
        %435 = vmatpush.msra.mxu0 0.0
        %436 = vmatpush.msra.mxu0 0.0
        %437 = vmatpush.msra.mxu0 0.0
        %438 = vmatpush.msra.mxu0 0.0
        %439 = vmatpush.msra.mxu0 0.0
        %440 = vmatpush.msra.mxu0 0.0
        %441 = vmatpush.msra.mxu0 0.0
        %442 = vmatpush.msra.mxu0 0.0
        %443 = vmatpush.msra.mxu0 %v388
        %444 = vmatpush.msra.mxu0 %v387
        %445 = vmatpush.msra.mxu0 %v386
        %446 = vmatpush.msra.mxu0 %v385
        %447 = vmatpush.msra.mxu0 %v384
        %448 = vmatpush.msra.mxu0 %v383
        %449 = vmatpush.msra.mxu0 %v382
        %450 = vmatpush.msra.mxu0 %v381
        %451 = vmatmul.f32.gmra.mxu0 %v393
        %v452 = vpop.f32.mrf.mxu0
        %v453 = vadd.f32 %v433, %v452
        %454 = vdwg.mxu0
        %v455 = vxor.u32 %v453, 2147483648
        %v456 = vmul.f32 %v455, 1.442695
        %v457 = vpow.pop %v456
        %v458 = vadd.f32 %v457, 1.0
        %v459 = vrcp.pop %v458
        %v460 = vmul.f32 %v458, %v459
        %v461 = vsub.f32 1.0, %v460
        %v462 = vmul.f32 %v459, %v461
        %v463 = vadd.f32 %v459, %v462
        %vm464 = vweird.f32 %v458
        %vm465 = vweird.f32 %v459
        %vm466 = vmor %vm464, %vm465
        %v467 = vsel %vm466, %v459, %v463
        %v468 = vand.u32 2147483647, %v458
        %vm469 = vcmp.eq.f32.partialorder %v468, 8.507059e+37
        %v470 = vand.u32 %v458, 2147483648
        %v471 = vor.u32 1.1754944e-38, %v470
        %v472 = vsel %vm469, %v471, %v467
        %v473 = vmul.f32 1.0, %v472
        %s474 = scalar_lea.vmem %s292, 320 [#allocation7]
        %v475 = vld [vmem:[%s474] sm:$0xff]
        %v476 = vld [vmem:[%s474 + $0x8] sm:$0xff]
        %v477 = vld [vmem:[%s474 + $0x10] sm:$0xff]
        %v478 = vld [vmem:[%s474 + $0x18] sm:$0xff]
        %v479 = vld [vmem:[%s474 + $0x20] sm:$0xff]
        %v480 = vld [vmem:[%s474 + $0x28] sm:$0xff]
        %v481 = vld [vmem:[%s474 + $0x30] sm:$0xff]
        %v482 = vld [vmem:[%s474 + $0x38] sm:$0xff]
        %v483 = vld [vmem:[%s474 + $0x40] sm:$0xff]
        %v484 = vld [vmem:[%s474 + $0x48] sm:$0xff]
        %v485 = vld [vmem:[%s474 + $0x50] sm:$0xff]
        %v486 = vld [vmem:[%s474 + $0x58] sm:$0xff]
        %v487 = vld [vmem:[%s474 + $0x60] sm:$0xff]
        %v488 = vld [vmem:[%s474 + $0x68] sm:$0xff]
        %v489 = vld [vmem:[%s474 + $0x70] sm:$0xff]
        %v490 = vld [vmem:[%s474 + $0x78] sm:$0xff]
        %v491 = vld [vmem:[%s474 + $0x80] sm:$0xff]
        %v492 = vld [vmem:[%s474 + $0x88] sm:$0xff]
        %v493 = vld [vmem:[%s474 + $0x90] sm:$0xff]
        %v494 = vld [vmem:[%s474 + $0x98] sm:$0xff]
        %v495 = vld [vmem:[%s474 + $0xa0] sm:$0xff]
        %v496 = vld [vmem:[%s474 + $0xa8] sm:$0xff]
        %v497 = vld [vmem:[%s474 + $0xb0] sm:$0xff]
        %v498 = vld [vmem:[%s474 + $0xb8] sm:$0xff]
        %v499 = vld [vmem:[%s474 + $0xc0] sm:$0xff]
        %v500 = vld [vmem:[%s474 + $0xc8] sm:$0xff]
        %v501 = vld [vmem:[%s474 + $0xd0] sm:$0xff]
        %v502 = vld [vmem:[%s474 + $0xd8] sm:$0xff]
        %v503 = vld [vmem:[%s474 + $0xe0] sm:$0xff]
        %v504 = vld [vmem:[%s474 + $0xe8] sm:$0xff]
        %v505 = vld [vmem:[%s474 + $0xf0] sm:$0xff]
        %v506 = vld [vmem:[%s474 + $0xf8] sm:$0xff]
        %v507 = vld [vmem:[%s474 + $0x100] sm:$0xff]
        %v508 = vld [vmem:[%s474 + $0x108] sm:$0xff]
        %v509 = vld [vmem:[%s474 + $0x110] sm:$0xff]
        %v510 = vld [vmem:[%s474 + $0x118] sm:$0xff]
        %v511 = vld [vmem:[%s474 + $0x120] sm:$0xff]
        %v512 = vld [vmem:[%s474 + $0x128] sm:$0xff]
        %v513 = vld [vmem:[%s474 + $0x130] sm:$0xff]
        %v514 = vld [vmem:[%s474 + $0x138] sm:$0xff]
        %v515 = vld [vmem:[%s302 + $0x1] sm:$0x1]
        %v516 = vperm.slane %v515, 0
        %517 = vmatpush.msra.mxu0 %v490
        %518 = vmatpush.msra.mxu0 %v489
        %519 = vmatpush.msra.mxu0 %v488
        %520 = vmatpush.msra.mxu0 %v487
        %521 = vmatpush.msra.mxu0 %v486
        %522 = vmatpush.msra.mxu0 %v485
        %523 = vmatpush.msra.mxu0 %v484
        %524 = vmatpush.msra.mxu0 %v483
        %525 = vmatpush.msra.mxu0 %v482
        %526 = vmatpush.msra.mxu0 %v481
        %527 = vmatpush.msra.mxu0 %v480
        %528 = vmatpush.msra.mxu0 %v479
        %529 = vmatpush.msra.mxu0 %v478
        %530 = vmatpush.msra.mxu0 %v477
        %531 = vmatpush.msra.mxu0 %v476
        %532 = vmatpush.msra.mxu0 %v475
        %533 = vmatmul.f32.gmra.mxu0 %v345
        %v534 = vpop.f32.mrf.mxu0
        %v535 = vadd.f32 %v516, %v534
        %536 = vdwg.mxu0
        %537 = vmatpush.msra.mxu0 %v506
        %538 = vmatpush.msra.mxu0 %v505
        %539 = vmatpush.msra.mxu0 %v504
        %540 = vmatpush.msra.mxu0 %v503
        %541 = vmatpush.msra.mxu0 %v502
        %542 = vmatpush.msra.mxu0 %v501
        %543 = vmatpush.msra.mxu0 %v500
        %544 = vmatpush.msra.mxu0 %v499
        %545 = vmatpush.msra.mxu0 %v498
        %546 = vmatpush.msra.mxu0 %v497
        %547 = vmatpush.msra.mxu0 %v496
        %548 = vmatpush.msra.mxu0 %v495
        %549 = vmatpush.msra.mxu0 %v494
        %550 = vmatpush.msra.mxu0 %v493
        %551 = vmatpush.msra.mxu0 %v492
        %552 = vmatpush.msra.mxu0 %v491
        %553 = vmatmul.f32.gmra.mxu0 %v346
        %v554 = vpop.f32.mrf.mxu0
        %v555 = vadd.f32 %v535, %v554
        %556 = vdwg.mxu0
        %557 = vmatpush.msra.mxu0 0.0
        %558 = vmatpush.msra.mxu0 0.0
        %559 = vmatpush.msra.mxu0 0.0
        %560 = vmatpush.msra.mxu0 0.0
        %561 = vmatpush.msra.mxu0 0.0
        %562 = vmatpush.msra.mxu0 0.0
        %563 = vmatpush.msra.mxu0 0.0
        %564 = vmatpush.msra.mxu0 0.0
        %565 = vmatpush.msra.mxu0 %v514
        %566 = vmatpush.msra.mxu0 %v513
        %567 = vmatpush.msra.mxu0 %v512
        %568 = vmatpush.msra.mxu0 %v511
        %569 = vmatpush.msra.mxu0 %v510
        %570 = vmatpush.msra.mxu0 %v509
        %571 = vmatpush.msra.mxu0 %v508
        %572 = vmatpush.msra.mxu0 %v507
        %573 = vmatmul.f32.gmra.mxu0 %v393
        %v574 = vpop.f32.mrf.mxu0
        %v575 = vadd.f32 %v555, %v574
        %576 = vdwg.mxu0
        %v577 = vxor.u32 %v575, 2147483648
        %v578 = vmul.f32 %v577, 1.442695
        %v579 = vpow.pop %v578
        %v580 = vadd.f32 %v579, 1.0
        %v581 = vrcp.pop %v580
        %v582 = vmul.f32 %v580, %v581
        %v583 = vsub.f32 1.0, %v582
        %v584 = vmul.f32 %v581, %v583
        %v585 = vadd.f32 %v581, %v584
        %vm586 = vweird.f32 %v580
        %vm587 = vweird.f32 %v581
        %vm588 = vmor %vm586, %vm587
        %v589 = vsel %vm588, %v581, %v585
        %v590 = vand.u32 2147483647, %v580
        %vm591 = vcmp.eq.f32.partialorder %v590, 8.507059e+37
        %v592 = vand.u32 %v580, 2147483648
        %v593 = vor.u32 1.1754944e-38, %v592
        %v594 = vsel %vm591, %v593, %v589
        %v595 = vmul.f32 1.0, %v594
        %s596 = scalar_lea.vmem %s292, 640 [#allocation7]
        %v597 = vld [vmem:[%s596] sm:$0xff]
        %v598 = vld [vmem:[%s596 + $0x8] sm:$0xff]
        %v599 = vld [vmem:[%s596 + $0x10] sm:$0xff]
        %v600 = vld [vmem:[%s596 + $0x18] sm:$0xff]
        %v601 = vld [vmem:[%s596 + $0x20] sm:$0xff]
        %v602 = vld [vmem:[%s596 + $0x28] sm:$0xff]
        %v603 = vld [vmem:[%s596 + $0x30] sm:$0xff]
        %v604 = vld [vmem:[%s596 + $0x38] sm:$0xff]
        %v605 = vld [vmem:[%s596 + $0x40] sm:$0xff]
        %v606 = vld [vmem:[%s596 + $0x48] sm:$0xff]
        %v607 = vld [vmem:[%s596 + $0x50] sm:$0xff]
        %v608 = vld [vmem:[%s596 + $0x58] sm:$0xff]
        %v609 = vld [vmem:[%s596 + $0x60] sm:$0xff]
        %v610 = vld [vmem:[%s596 + $0x68] sm:$0xff]
        %v611 = vld [vmem:[%s596 + $0x70] sm:$0xff]
        %v612 = vld [vmem:[%s596 + $0x78] sm:$0xff]
        %v613 = vld [vmem:[%s596 + $0x80] sm:$0xff]
        %v614 = vld [vmem:[%s596 + $0x88] sm:$0xff]
        %v615 = vld [vmem:[%s596 + $0x90] sm:$0xff]
        %v616 = vld [vmem:[%s596 + $0x98] sm:$0xff]
        %v617 = vld [vmem:[%s596 + $0xa0] sm:$0xff]
        %v618 = vld [vmem:[%s596 + $0xa8] sm:$0xff]
        %v619 = vld [vmem:[%s596 + $0xb0] sm:$0xff]
        %v620 = vld [vmem:[%s596 + $0xb8] sm:$0xff]
        %v621 = vld [vmem:[%s596 + $0xc0] sm:$0xff]
        %v622 = vld [vmem:[%s596 + $0xc8] sm:$0xff]
        %v623 = vld [vmem:[%s596 + $0xd0] sm:$0xff]
        %v624 = vld [vmem:[%s596 + $0xd8] sm:$0xff]
        %v625 = vld [vmem:[%s596 + $0xe0] sm:$0xff]
        %v626 = vld [vmem:[%s596 + $0xe8] sm:$0xff]
        %v627 = vld [vmem:[%s596 + $0xf0] sm:$0xff]
        %v628 = vld [vmem:[%s596 + $0xf8] sm:$0xff]
        %v629 = vld [vmem:[%s596 + $0x100] sm:$0xff]
        %v630 = vld [vmem:[%s596 + $0x108] sm:$0xff]
        %v631 = vld [vmem:[%s596 + $0x110] sm:$0xff]
        %v632 = vld [vmem:[%s596 + $0x118] sm:$0xff]
        %v633 = vld [vmem:[%s596 + $0x120] sm:$0xff]
        %v634 = vld [vmem:[%s596 + $0x128] sm:$0xff]
        %v635 = vld [vmem:[%s596 + $0x130] sm:$0xff]
        %v636 = vld [vmem:[%s596 + $0x138] sm:$0xff]
        %v637 = vld [vmem:[%s302 + $0x2] sm:$0x1]
        %v638 = vperm.slane %v637, 0
        %639 = vmatpush.msra.mxu0 %v612
        %640 = vmatpush.msra.mxu0 %v611
        %641 = vmatpush.msra.mxu0 %v610
        %642 = vmatpush.msra.mxu0 %v609
        %643 = vmatpush.msra.mxu0 %v608
        %644 = vmatpush.msra.mxu0 %v607
        %645 = vmatpush.msra.mxu0 %v606
        %646 = vmatpush.msra.mxu0 %v605
        %647 = vmatpush.msra.mxu0 %v604
        %648 = vmatpush.msra.mxu0 %v603
        %649 = vmatpush.msra.mxu0 %v602
        %650 = vmatpush.msra.mxu0 %v601
        %651 = vmatpush.msra.mxu0 %v600
        %652 = vmatpush.msra.mxu0 %v599
        %653 = vmatpush.msra.mxu0 %v598
        %654 = vmatpush.msra.mxu0 %v597
        %655 = vmatmul.f32.gmra.mxu0 %v345
        %v656 = vpop.f32.mrf.mxu0
        %v657 = vadd.f32 %v638, %v656
        %658 = vdwg.mxu0
        %659 = vmatpush.msra.mxu0 %v628
        %660 = vmatpush.msra.mxu0 %v627
        %661 = vmatpush.msra.mxu0 %v626
        %662 = vmatpush.msra.mxu0 %v625
        %663 = vmatpush.msra.mxu0 %v624
        %664 = vmatpush.msra.mxu0 %v623
        %665 = vmatpush.msra.mxu0 %v622
        %666 = vmatpush.msra.mxu0 %v621
        %667 = vmatpush.msra.mxu0 %v620
        %668 = vmatpush.msra.mxu0 %v619
        %669 = vmatpush.msra.mxu0 %v618
        %670 = vmatpush.msra.mxu0 %v617
        %671 = vmatpush.msra.mxu0 %v616
        %672 = vmatpush.msra.mxu0 %v615
        %673 = vmatpush.msra.mxu0 %v614
        %674 = vmatpush.msra.mxu0 %v613
        %675 = vmatmul.f32.gmra.mxu0 %v346
        %v676 = vpop.f32.mrf.mxu0
        %v677 = vadd.f32 %v657, %v676
        %678 = vdwg.mxu0
        %679 = vmatpush.msra.mxu0 0.0
        %680 = vmatpush.msra.mxu0 0.0
        %681 = vmatpush.msra.mxu0 0.0
        %682 = vmatpush.msra.mxu0 0.0
        %683 = vmatpush.msra.mxu0 0.0
        %684 = vmatpush.msra.mxu0 0.0
        %685 = vmatpush.msra.mxu0 0.0
        %686 = vmatpush.msra.mxu0 0.0
        %687 = vmatpush.msra.mxu0 %v636
        %688 = vmatpush.msra.mxu0 %v635
        %689 = vmatpush.msra.mxu0 %v634
        %690 = vmatpush.msra.mxu0 %v633
        %691 = vmatpush.msra.mxu0 %v632
        %692 = vmatpush.msra.mxu0 %v631
        %693 = vmatpush.msra.mxu0 %v630
        %694 = vmatpush.msra.mxu0 %v629
        %695 = vmatmul.f32.gmra.mxu0 %v393
        %v696 = vpop.f32.mrf.mxu0
        %v697 = vadd.f32 %v677, %v696
        %698 = vdwg.mxu0
        %v699 = vtanh.pop %v697
        %s700 = scalar_lea.vmem %s292, 960 [#allocation7]
        %v701 = vld [vmem:[%s700] sm:$0xff]
        %v702 = vld [vmem:[%s700 + $0x8] sm:$0xff]
        %v703 = vld [vmem:[%s700 + $0x10] sm:$0xff]
        %v704 = vld [vmem:[%s700 + $0x18] sm:$0xff]
        %v705 = vld [vmem:[%s700 + $0x20] sm:$0xff]
        %v706 = vld [vmem:[%s700 + $0x28] sm:$0xff]
        %v707 = vld [vmem:[%s700 + $0x30] sm:$0xff]
        %v708 = vld [vmem:[%s700 + $0x38] sm:$0xff]
        %v709 = vld [vmem:[%s700 + $0x40] sm:$0xff]
        %v710 = vld [vmem:[%s700 + $0x48] sm:$0xff]
        %v711 = vld [vmem:[%s700 + $0x50] sm:$0xff]
        %v712 = vld [vmem:[%s700 + $0x58] sm:$0xff]
        %v713 = vld [vmem:[%s700 + $0x60] sm:$0xff]
        %v714 = vld [vmem:[%s700 + $0x68] sm:$0xff]
        %v715 = vld [vmem:[%s700 + $0x70] sm:$0xff]
        %v716 = vld [vmem:[%s700 + $0x78] sm:$0xff]
        %v717 = vld [vmem:[%s700 + $0x80] sm:$0xff]
        %v718 = vld [vmem:[%s700 + $0x88] sm:$0xff]
        %v719 = vld [vmem:[%s700 + $0x90] sm:$0xff]
        %v720 = vld [vmem:[%s700 + $0x98] sm:$0xff]
        %v721 = vld [vmem:[%s700 + $0xa0] sm:$0xff]
        %v722 = vld [vmem:[%s700 + $0xa8] sm:$0xff]
        %v723 = vld [vmem:[%s700 + $0xb0] sm:$0xff]
        %v724 = vld [vmem:[%s700 + $0xb8] sm:$0xff]
        %v725 = vld [vmem:[%s700 + $0xc0] sm:$0xff]
        %v726 = vld [vmem:[%s700 + $0xc8] sm:$0xff]
        %v727 = vld [vmem:[%s700 + $0xd0] sm:$0xff]
        %v728 = vld [vmem:[%s700 + $0xd8] sm:$0xff]
        %v729 = vld [vmem:[%s700 + $0xe0] sm:$0xff]
        %v730 = vld [vmem:[%s700 + $0xe8] sm:$0xff]
        %v731 = vld [vmem:[%s700 + $0xf0] sm:$0xff]
        %v732 = vld [vmem:[%s700 + $0xf8] sm:$0xff]
        %v733 = vld [vmem:[%s700 + $0x100] sm:$0xff]
        %v734 = vld [vmem:[%s700 + $0x108] sm:$0xff]
        %v735 = vld [vmem:[%s700 + $0x110] sm:$0xff]
        %v736 = vld [vmem:[%s700 + $0x118] sm:$0xff]
        %v737 = vld [vmem:[%s700 + $0x120] sm:$0xff]
        %v738 = vld [vmem:[%s700 + $0x128] sm:$0xff]
        %v739 = vld [vmem:[%s700 + $0x130] sm:$0xff]
        %v740 = vld [vmem:[%s700 + $0x138] sm:$0xff]
        %v741 = vld [vmem:[%s302 + $0x3] sm:$0x1]
        %v742 = vperm.slane %v741, 0
        %743 = vmatpush.msra.mxu0 %v716
        %744 = vmatpush.msra.mxu0 %v715
        %745 = vmatpush.msra.mxu0 %v714
        %746 = vmatpush.msra.mxu0 %v713
        %747 = vmatpush.msra.mxu0 %v712
        %748 = vmatpush.msra.mxu0 %v711
        %749 = vmatpush.msra.mxu0 %v710
        %750 = vmatpush.msra.mxu0 %v709
        %751 = vmatpush.msra.mxu0 %v708
        %752 = vmatpush.msra.mxu0 %v707
        %753 = vmatpush.msra.mxu0 %v706
        %754 = vmatpush.msra.mxu0 %v705
        %755 = vmatpush.msra.mxu0 %v704
        %756 = vmatpush.msra.mxu0 %v703
        %757 = vmatpush.msra.mxu0 %v702
        %758 = vmatpush.msra.mxu0 %v701
        %759 = vmatmul.f32.gmra.mxu0 %v345
        %v760 = vpop.f32.mrf.mxu0
        %v761 = vadd.f32 %v742, %v760
        %762 = vdwg.mxu0
        %763 = vmatpush.msra.mxu0 %v732
        %764 = vmatpush.msra.mxu0 %v731
        %765 = vmatpush.msra.mxu0 %v730
        %766 = vmatpush.msra.mxu0 %v729
        %767 = vmatpush.msra.mxu0 %v728
        %768 = vmatpush.msra.mxu0 %v727
        %769 = vmatpush.msra.mxu0 %v726
        %770 = vmatpush.msra.mxu0 %v725
        %771 = vmatpush.msra.mxu0 %v724
        %772 = vmatpush.msra.mxu0 %v723
        %773 = vmatpush.msra.mxu0 %v722
        %774 = vmatpush.msra.mxu0 %v721
        %775 = vmatpush.msra.mxu0 %v720
        %776 = vmatpush.msra.mxu0 %v719
        %777 = vmatpush.msra.mxu0 %v718
        %778 = vmatpush.msra.mxu0 %v717
        %779 = vmatmul.f32.gmra.mxu0 %v346
        %v780 = vpop.f32.mrf.mxu0
        %v781 = vadd.f32 %v761, %v780
        %782 = vdwg.mxu0
        %783 = vmatpush.msra.mxu0 0.0
        %784 = vmatpush.msra.mxu0 0.0
        %785 = vmatpush.msra.mxu0 0.0
        %786 = vmatpush.msra.mxu0 0.0
        %787 = vmatpush.msra.mxu0 0.0
        %788 = vmatpush.msra.mxu0 0.0
        %789 = vmatpush.msra.mxu0 0.0
        %790 = vmatpush.msra.mxu0 0.0
        %791 = vmatpush.msra.mxu0 %v740
        %792 = vmatpush.msra.mxu0 %v739
        %793 = vmatpush.msra.mxu0 %v738
        %794 = vmatpush.msra.mxu0 %v737
        %795 = vmatpush.msra.mxu0 %v736
        %796 = vmatpush.msra.mxu0 %v735
        %797 = vmatpush.msra.mxu0 %v734
        %798 = vmatpush.msra.mxu0 %v733
        %799 = vmatmul.f32.gmra.mxu0 %v393
        %v800 = vpop.f32.mrf.mxu0
        %v801 = vadd.f32 %v781, %v800
        %802 = vdwg.mxu0
        %v803 = vxor.u32 %v801, 2147483648
        %v804 = vmul.f32 %v803, 1.442695
        %v805 = vpow.pop %v804
        %v806 = vadd.f32 %v805, 1.0
        %v807 = vrcp.pop %v806
        %v808 = vmul.f32 %v806, %v807
        %v809 = vsub.f32 1.0, %v808
        %v810 = vmul.f32 %v807, %v809
        %v811 = vadd.f32 %v807, %v810
        %vm812 = vweird.f32 %v806
        %vm813 = vweird.f32 %v807
        %vm814 = vmor %vm812, %vm813
        %v815 = vsel %vm814, %v807, %v811
        %v816 = vand.u32 2147483647, %v806
        %vm817 = vcmp.eq.f32.partialorder %v816, 8.507059e+37
        %v818 = vand.u32 %v806, 2147483648
        %v819 = vor.u32 1.1754944e-38, %v818
        %v820 = vsel %vm817, %v819, %v815
        %v821 = vmul.f32 1.0, %v820
        %v822 = vmul.f32 %v473, %v348
        %v823 = vmul.f32 %v595, %v699
        %v824 = vadd.f32 %v822, %v823
        %v825 = vtanh.pop %v824
        %v826 = vmul.f32 %v825, %v821
        %827 = vst [vmem:[%s337] sm:$0xff] %v826
        %828 = vst [vmem:[%s344] sm:$0xff] %v824
        %s829 = sand.u32 %s137, 1
        %s830 = scalar_lea.sflag [#allocation4], %s829
        %s831 = sand.u32 %s137, 1
        %s832 = smul.addr %s831, 8
        %s833 = scalar_lea.vmem [#allocation10], %s832
        %s834 = sand.u32 %s163, 1
        %s835 = scalar_lea.sflag [#allocation12], %s834
        %s836 = sand.u32 %s163, 1
        %s837 = smul.addr %s836, 8
        %s838 = scalar_lea.vmem [#allocation11], %s837
        // Predicated region
        $region53: #{tpu_custom_call.1} parent=35 // pred_check
          %p839 = pneg %p147
        $region54: #{tpu_custom_call.1} parent=35 // pred_check_branch
          %841 = sbr.rel (%p839) target = $region56
        $region55: #{tpu_custom_call.1} parent=35 // pred_region
          %843 = vsyncadd %s830, 0
          %s844 = smul.addr %s30, 8
          %s845 = scalar_lea.hbm %s4, %s844
          %s847 = sshll.u32 %s833, 4
          %s848 = int_to_ptr.vmem [resolvable:$true] %s847
          %s849 = sshll.u32 %s845, 4
          %s850 = int_to_ptr.hbm [resolvable:$true] %s849
          %852 = dma.vmem_to_hbm [thread:$0]  %s848, 128, %s850, %s830
        $region56: #{tpu_custom_call.1} parent=35 // pred_fallthru
          _
        // Predicated region
        $region57: #{tpu_custom_call.1} parent=35 // pred_check
          %p853 = pneg %p173
        $region58: #{tpu_custom_call.1} parent=35 // pred_check_branch
          %855 = sbr.rel (%p853) target = $region60
        $region59: #{tpu_custom_call.1} parent=35 // pred_region
          %857 = vsyncadd %s835, 0
          %s858 = smul.addr %s30, 8
          %s859 = scalar_lea.hbm %s5, %s858
          %s861 = sshll.u32 %s838, 4
          %s862 = int_to_ptr.vmem [resolvable:$true] %s861
          %s863 = sshll.u32 %s859, 4
          %s864 = int_to_ptr.hbm [resolvable:$true] %s863
          %866 = dma.vmem_to_hbm [thread:$0]  %s862, 128, %s864, %s835
        $region60: #{tpu_custom_call.1} parent=35 // pred_fallthru
          _
      $region36: #{tpu_custom_call.1} parent=5 // pred_fallthru
        _
      %p867 = scmp.le.s32.totalorder 2, %s25
      // Predicated region
      $region61: #{tpu_custom_call.1} parent=5 // pred_check
        %p868 = pneg %p867
      $region62: #{tpu_custom_call.1} parent=5 // pred_check_branch
        %870 = sbr.rel (%p868) target = $region64
      $region63: #{tpu_custom_call.1} parent=5 // pred_region
        %s871 = ssub.s32 %s25, 2
        // Predicated region
        $region65: #{tpu_custom_call.1} parent=63 // pred_check
          %p872 = pneg %p153
        $region66: #{tpu_custom_call.1} parent=63 // pred_check_branch
          %874 = sbr.rel (%p872) target = $region68
        $region67: #{tpu_custom_call.1} parent=63 // pred_region
          %s875 = sand.u32 %s138, 1
          %s876 = scalar_lea.sflag [#allocation4], %s875
          %s877 = sand.u32 %s138, 1
          %s878 = smul.addr %s877, 8
          %s879 = scalar_lea.vmem [#allocation10], %s878
          %881 = dma.done %s876, 128
        $region68: #{tpu_custom_call.1} parent=63 // pred_fallthru
          _
        // Predicated region
        $region69: #{tpu_custom_call.1} parent=63 // pred_check
          %p882 = pneg %p179
        $region70: #{tpu_custom_call.1} parent=63 // pred_check_branch
          %884 = sbr.rel (%p882) target = $region72
        $region71: #{tpu_custom_call.1} parent=63 // pred_region
          %s885 = sand.u32 %s164, 1
          %s886 = scalar_lea.sflag [#allocation12], %s885
          %s887 = sand.u32 %s164, 1
          %s888 = smul.addr %s887, 8
          %s889 = scalar_lea.vmem [#allocation11], %s888
          %891 = dma.done %s886, 128
        $region72: #{tpu_custom_call.1} parent=63 // pred_fallthru
          _
      $region64: #{tpu_custom_call.1} parent=5 // pred_fallthru
        _
    $region6: #{tpu_custom_call.1} parent=1 // loop_footer
      %s29 = sadd.s32 1, %s25
    $region7: #{tpu_custom_call.1} parent=1 // loop_footer_branch
      %24 = sbr.rel target = $region3
    $region8: #{tpu_custom_call.1} parent=1 // loop_exit
      _
    %892 = vsyncpa [#allocation3], 1
    %s893 = scalar_lea.sflag [#allocation3], 1
    %894 = vsyncpa %s893, 1
    %895 = vsyncpa [#allocation6], 1
    %s896 = scalar_lea.sflag [#allocation6], 1
    %897 = vsyncpa %s896, 1
    %898 = vsyncpa [#allocation9], 1
    %s899 = scalar_lea.sflag [#allocation9], 1
    %900 = vsyncpa %s899, 1
    %901 = vsyncpa [#allocation4], 1
    %s902 = scalar_lea.sflag [#allocation4], 1
    %903 = vsyncpa %s902, 1
    %904 = vsyncpa [#allocation12], 1
    %s905 = scalar_lea.sflag [#allocation12], 1
    %906 = vsyncpa %s905, 1

</llo_original>
